<compile_context>
chip_gen: v6e
topology: v6e:2x2x1
jax: 0.10.0
libtpu: 0.0.40
codegen_flags: <defaults>
</compile_context>

<pallas_src>
import jax
import jax.numpy as jnp
from jax.experimental import pallas as pl
from jax.experimental.pallas import tpu as pltpu

LANE = 128            # TPU lane width: batch is laid out lane-major
SUBLANE = 8           # f32 sublane count: tile row counts are multiples of this
MAX_TILE_ROWS = 2048  # 2048x128 f32 = 1 MiB/plane -> 2 MiB in + 1 MiB out per block


def _sigmoid(x):
    # One EUP op (tanh) + two cheap VPU ops; exact-math equivalent of 1/(1+exp(-x)).
    return 0.5 * jnp.tanh(0.5 * x) + 0.5


def xor_mlp_kernel(params_ref, x_ref, o_ref):
    """Fused XOR-MLP forward on a dense (tile_rows, 128) batch tile.

    x_ref: (2, tile_rows, 128) f32 -- feature-major, batch dense over
           (sublane, lane).  o_ref: (tile_rows, 128) f32.
    params_ref (SMEM, scalar-prefetched, shape (9,)):
      [W1[0,0], W1[0,1], W1[1,0], W1[1,1], b1[0], b1[1], W2[0,0], W2[1,0], b2[0]]
    with h = x @ W1 + b1, y = h @ W2 + b2 (same math as nn.Linear).
    """
    x0 = x_ref[0]                      # (tile_rows, 128): feature 0
    x1 = x_ref[1]                      # (tile_rows, 128): feature 1

    w1_00 = params_ref[0]
    w1_01 = params_ref[1]
    w1_10 = params_ref[2]
    w1_11 = params_ref[3]
    b1_0 = params_ref[4]
    b1_1 = params_ref[5]
    w2_0 = params_ref[6]
    w2_1 = params_ref[7]
    b2 = params_ref[8]

    # layer1 + sigmoid:  h[:, j] = sigmoid(sum_i x[:, i] * W1[i, j] + b1[j])
    h0 = _sigmoid(x0 * w1_00 + x1 * w1_10 + b1_0)
    h1 = _sigmoid(x0 * w1_01 + x1 * w1_11 + b1_1)

    # layer2 + sigmoid
    y = _sigmoid(h0 * w2_0 + h1 * w2_1 + b2)

    o_ref[...] = y.astype(o_ref.dtype)


def pack_params(w1, b1, w2, b2):
    """Pack W1 (2,2), b1 (2,), W2 (2,1), b2 (1,) into one flat f32 vector."""
    return jnp.concatenate(
        [w1.reshape(-1), b1.reshape(-1), w2.reshape(-1), b2.reshape(-1)]
    ).astype(jnp.float32)


def _jnp_forward(x, w1, b1, w2, b2):
    h = jax.nn.sigmoid(x.astype(jnp.float32) @ w1 + b1)
    return jax.nn.sigmoid(h @ w2 + b2)


def _cdiv(a, b):
    return -(-a // b)


def _choose_tiling(batch):
    """Pick (tile_rows, padded_rows, grid) for a lane-major batch layout."""
    rows = _cdiv(batch, LANE)                      # 128-lane rows needed
    rows8 = _cdiv(rows, SUBLANE) * SUBLANE         # pad to a sublane multiple
    if rows8 <= SUBLANE:
        tile_rows = SUBLANE                        # tiny batch: single 8-row tile
    else:
        # >= 2 tiles so both v7x TensorCores get work; cap the tile so the
        # double-buffered VMEM footprint stays ~6 MiB on every generation.
        tile_rows = min(_cdiv(rows8, 2 * SUBLANE) * SUBLANE, MAX_TILE_ROWS)
    rows_p = _cdiv(rows8, tile_rows) * tile_rows
    return tile_rows, rows_p, rows_p // tile_rows


def xor_model_forward(x, w1, b1, w2, b2, *, min_pallas_batch=512):
    """sigmoid(sigmoid(x @ W1 + b1) @ W2 + b2) for x of shape (B, 2) -> (B, 1)."""
    B = x.shape[0]

    # Small-batch fast path: pad/transpose + kernel launch overhead would dwarf
    # the actual work; a fused XLA elementwise graph is faster.
    if B < min_pallas_batch:
        return _jnp_forward(x, w1, b1, w2, b2)

    params = pack_params(w1, b1, w2, b2)                    # (9,) -> scalar prefetch

    tile_rows, rows_p, grid = _choose_tiling(B)
    bp = rows_p * LANE

    # Feature-major, batch on (sublane, lane): element b -> [f, b // 128, b % 128].
    xT = jnp.pad(x.astype(jnp.float32), ((0, bp - B), (0, 0))).T      # (2, bp)
    xT = xT.reshape(2, rows_p, LANE)                                   # free reshape

    o = pl.pallas_call(
        xor_mlp_kernel,
        out_shape=jax.ShapeDtypeStruct((rows_p, LANE), jnp.float32),
        grid_spec=pltpu.PrefetchScalarGridSpec(
            num_scalar_prefetch=1,
            grid=(grid,),
            in_specs=[
                pl.BlockSpec((2, tile_rows, LANE), lambda i, params: (0, i, 0)),
            ],
            out_specs=pl.BlockSpec((tile_rows, LANE), lambda i, params: (i, 0)),
        ),
        compiler_params=pltpu.CompilerParams(
            dimension_semantics=("parallel",),     # batch tiles shard across TCs
        ),
    )(params, xT)

    # (rows_p, 128) row-major == batch order; free reshape + slice back to (B, 1).
    return o.reshape(bp, 1)[:B]


def init_params(key):
    """Deterministic init mimicking nn.Linear's U(-1/sqrt(fan_in), 1/sqrt(fan_in))."""
    k1, k2, k3, k4 = jax.random.split(key, 4)
    bound = 1.0 / jnp.sqrt(2.0)   # fan_in = 2 for both layers
    w1 = jax.random.uniform(k1, (2, 2), jnp.float32, -bound, bound)
    b1 = jax.random.uniform(k2, (2,), jnp.float32, -bound, bound)
    w2 = jax.random.uniform(k3, (2, 1), jnp.float32, -bound, bound)
    b2 = jax.random.uniform(k4, (1,), jnp.float32, -bound, bound)
    return w1, b1, w2, b2


def reference_forward(x, w1, b1, w2, b2):
    h = jax.nn.sigmoid(x @ w1 + b1)
    return jax.nn.sigmoid(h @ w2 + b2)


if __name__ == "__main__":
    key = jax.random.PRNGKey(0)
    kx, kp, kx2, kx3 = jax.random.split(key, 4)

    w1, b1, w2, b2 = init_params(kp)

    # 1) Classic XOR inputs plus a few random rows -> batch of 8 (force Pallas path).
    xor_rows = jnp.array([[0.0, 0.0], [0.0, 1.0], [1.0, 0.0], [1.0, 1.0]],
                         dtype=jnp.float32)
    rand_rows = jax.random.uniform(kx, (4, 2), jnp.float32)
    x = jnp.concatenate([xor_rows, rand_rows], axis=0)                 # (8, 2)
    out = jax.block_until_ready(
        xor_model_forward(x, w1, b1, w2, b2, min_pallas_batch=0))
    ref = reference_forward(x, w1, b1, w2, b2)
    assert out.shape == (8, 1) and out.dtype == jnp.float32
    assert jnp.allclose(out, ref, atol=1e-4, rtol=1e-4), (out, ref)

    # 2) Non-128-multiple batch: exercises pad + slice path (force Pallas path).
    x2 = jax.random.uniform(kx2, (200, 2), jnp.float32)
    out2 = jax.block_until_ready(
        xor_model_forward(x2, w1, b1, w2, b2, min_pallas_batch=0))
    ref2 = reference_forward(x2, w1, b1, w2, b2)
    assert out2.shape == (200, 1)
    assert jnp.allclose(out2, ref2, atol=1e-4, rtol=1e-4), (out2, ref2)

    # 3) Larger batch: exercises the multi-tile grid (>= 2 tiles for v7x megacore).
    x3 = jax.random.uniform(kx3, (3000, 2), jnp.float32)
    out3 = jax.block_until_ready(xor_model_forward(x3, w1, b1, w2, b2))
    ref3 = reference_forward(x3, w1, b1, w2, b2)
    assert out3.shape == (3000, 1)
    assert jnp.allclose(out3, ref3, atol=1e-4, rtol=1e-4)

    # 4) Default small-batch fast path (plain jnp, no Pallas launch).
    out4 = jax.block_until_ready(xor_model_forward(x, w1, b1, w2, b2))
    assert jnp.allclose(out4, ref, atol=1e-5, rtol=1e-5)

    print("KERNEL_OK")
</pallas_src>

<mosaic_0001>
module attributes {stable_mosaic.version = 11 : i64} {
  func.func @xor_mlp_kernel(%arg0: i32, %arg1: memref<9xf32, #tpu.memory_space<smem>>, %arg2: memref<2x8x128xf32, #tpu.memory_space<vmem>>, %arg3: memref<8x128xf32, #tpu.memory_space<vmem>>) attributes {dimension_semantics = [#tpu.dimension_semantics<parallel>], iteration_bounds = array<i64: 1>, scalar_prefetch = 1 : i64, scratch_operands = 0 : i64, tpu.core_type = #tpu.core_type<tc>, window_params = [{transform_indices = @transform_0, window_bounds = array<i64: 2, 8, 128>}, {transform_indices = @transform_1, window_bounds = array<i64: 8, 128>}]} {
    %c0 = arith.constant 0 : index
    %c0_0 = arith.constant 0 : index
    %c0_1 = arith.constant 0 : index
    %0 = vector.load %arg2[%c0, %c0_0, %c0_1] : memref<2x8x128xf32, #tpu.memory_space<vmem>>, vector<1x8x128xf32>
    %1 = vector.shape_cast %0 : vector<1x8x128xf32> to vector<8x128xf32>
    %c1 = arith.constant 1 : index
    %c0_2 = arith.constant 0 : index
    %c0_3 = arith.constant 0 : index
    %2 = vector.load %arg2[%c1, %c0_2, %c0_3] : memref<2x8x128xf32, #tpu.memory_space<vmem>>, vector<1x8x128xf32>
    %3 = vector.shape_cast %2 : vector<1x8x128xf32> to vector<8x128xf32>
    %c0_4 = arith.constant 0 : index
    %4 = memref.load %arg1[%c0_4] : memref<9xf32, #tpu.memory_space<smem>>
    %c1_5 = arith.constant 1 : index
    %5 = memref.load %arg1[%c1_5] : memref<9xf32, #tpu.memory_space<smem>>
    %c2 = arith.constant 2 : index
    %6 = memref.load %arg1[%c2] : memref<9xf32, #tpu.memory_space<smem>>
    %c3 = arith.constant 3 : index
    %7 = memref.load %arg1[%c3] : memref<9xf32, #tpu.memory_space<smem>>
    %c4 = arith.constant 4 : index
    %8 = memref.load %arg1[%c4] : memref<9xf32, #tpu.memory_space<smem>>
    %c5 = arith.constant 5 : index
    %9 = memref.load %arg1[%c5] : memref<9xf32, #tpu.memory_space<smem>>
    %c6 = arith.constant 6 : index
    %10 = memref.load %arg1[%c6] : memref<9xf32, #tpu.memory_space<smem>>
    %c7 = arith.constant 7 : index
    %11 = memref.load %arg1[%c7] : memref<9xf32, #tpu.memory_space<smem>>
    %c8 = arith.constant 8 : index
    %12 = memref.load %arg1[%c8] : memref<9xf32, #tpu.memory_space<smem>>
    %13 = vector.broadcast %4 : f32 to vector<8x128xf32>
    %14 = arith.mulf %1, %13 : vector<8x128xf32>
    %15 = vector.broadcast %6 : f32 to vector<8x128xf32>
    %16 = arith.mulf %3, %15 : vector<8x128xf32>
    %17 = arith.addf %14, %16 : vector<8x128xf32>
    %18 = vector.broadcast %8 : f32 to vector<8x128xf32>
    %19 = arith.addf %17, %18 : vector<8x128xf32>
    %cst = arith.constant 5.000000e-01 : f32
    %20 = vector.broadcast %cst : f32 to vector<8x128xf32>
    %21 = arith.mulf %20, %19 : vector<8x128xf32>
    %22 = math.tanh %21 : vector<8x128xf32>
    %cst_6 = arith.constant 5.000000e-01 : f32
    %23 = vector.broadcast %cst_6 : f32 to vector<8x128xf32>
    %24 = arith.mulf %23, %22 : vector<8x128xf32>
    %cst_7 = arith.constant 5.000000e-01 : f32
    %25 = vector.broadcast %cst_7 : f32 to vector<8x128xf32>
    %26 = arith.addf %24, %25 : vector<8x128xf32>
    %27 = vector.broadcast %5 : f32 to vector<8x128xf32>
    %28 = arith.mulf %1, %27 : vector<8x128xf32>
    %29 = vector.broadcast %7 : f32 to vector<8x128xf32>
    %30 = arith.mulf %3, %29 : vector<8x128xf32>
    %31 = arith.addf %28, %30 : vector<8x128xf32>
    %32 = vector.broadcast %9 : f32 to vector<8x128xf32>
    %33 = arith.addf %31, %32 : vector<8x128xf32>
    %cst_8 = arith.constant 5.000000e-01 : f32
    %34 = vector.broadcast %cst_8 : f32 to vector<8x128xf32>
    %35 = arith.mulf %34, %33 : vector<8x128xf32>
    %36 = math.tanh %35 : vector<8x128xf32>
    %cst_9 = arith.constant 5.000000e-01 : f32
    %37 = vector.broadcast %cst_9 : f32 to vector<8x128xf32>
    %38 = arith.mulf %37, %36 : vector<8x128xf32>
    %cst_10 = arith.constant 5.000000e-01 : f32
    %39 = vector.broadcast %cst_10 : f32 to vector<8x128xf32>
    %40 = arith.addf %38, %39 : vector<8x128xf32>
    %41 = vector.broadcast %10 : f32 to vector<8x128xf32>
    %42 = arith.mulf %26, %41 : vector<8x128xf32>
    %43 = vector.broadcast %11 : f32 to vector<8x128xf32>
    %44 = arith.mulf %40, %43 : vector<8x128xf32>
    %45 = arith.addf %42, %44 : vector<8x128xf32>
    %46 = vector.broadcast %12 : f32 to vector<8x128xf32>
    %47 = arith.addf %45, %46 : vector<8x128xf32>
    %cst_11 = arith.constant 5.000000e-01 : f32
    %48 = vector.broadcast %cst_11 : f32 to vector<8x128xf32>
    %49 = arith.mulf %48, %47 : vector<8x128xf32>
    %50 = math.tanh %49 : vector<8x128xf32>
    %cst_12 = arith.constant 5.000000e-01 : f32
    %51 = vector.broadcast %cst_12 : f32 to vector<8x128xf32>
    %52 = arith.mulf %51, %50 : vector<8x128xf32>
    %cst_13 = arith.constant 5.000000e-01 : f32
    %53 = vector.broadcast %cst_13 : f32 to vector<8x128xf32>
    %54 = arith.addf %52, %53 : vector<8x128xf32>
    %c0_14 = arith.constant 0 : index
    %c0_15 = arith.constant 0 : index
    %55 = vector.load %arg3[%c0_14, %c0_15] : memref<8x128xf32, #tpu.memory_space<vmem>>, vector<8x128xf32>
    tpu.vector_store %arg3[%c0_14, %c0_15], %54 {strides = array<i32>} : memref<8x128xf32, #tpu.memory_space<vmem>>, vector<8x128xf32>,
    return
  }
  func.func @transform_0(%arg0: i32, %arg1: memref<9xf32, #tpu.memory_space<smem>>) -> (i32, i32, i32) {
    %c0_i32 = arith.constant 0 : i32
    %c0_i32_0 = arith.constant 0 : i32
    %c0_i32_1 = arith.constant 0 : i32
    return %c0_i32, %arg0, %c0_i32_0 : i32, i32, i32
  }
  func.func @transform_1(%arg0: i32, %arg1: memref<9xf32, #tpu.memory_space<smem>>) -> (i32, i32) {
    %c0_i32 = arith.constant 0 : i32
    %c0_i32_0 = arith.constant 0 : i32
    return %arg0, %c0_i32 : i32, i32
  }
}

</mosaic_0001>

<llo_original>
// kernel: tpu_custom_call.1
$region0: #{tpu_custom_call.1}
  #allocation0 [shape = 'u32[]', space=smem, size = 0x4, offset = 0x4, fixed_abs, tag = 'smem constant byte address 0x4 - core index']
  #allocation1 [shape = 'u32[144,128]{1,0:T(1,128)}', space=vmem, size = 0x12000, scoped, tag = 'internal scratch']
  #allocation2 [shape = 's32[1]{0}', space=sflag, size = 0x4, scoped, tag = 'scoped memory for tpu_custom_call.1']
  #allocation3 [shape = 'u8[512]{0}', space=smem, size = 0x200, scoped, tag = 'prefetched SMEM operand 0']
  %s0 = inlined_call_operand.hbm [shape: f32[9], index: 0, kind: input, shape index: {}]
  %s1 = inlined_call_operand.hbm [shape: f32[2,8,128], index: 1, kind: input, shape index: {}]
  %s2 = inlined_call_operand.hbm [shape: f32[8,128], index: 2, kind: output, shape index: {}]
  %s3 = sld [smem:[#allocation0]]
  $region18: #{tpu_custom_call.1} parent=0
    _
  %s5 = ssub.s32 1, %s3
  %s6 = scalar_select 0, %s5, %s3
  %8 = dma.hbm_to_smem %s0, 16, [#allocation3], [#allocation2]
  %9 = dma.done [#allocation2], 16
  %10 = sfence
  $region1: #{tpu_custom_call.1} parent=0
    #allocation4 [shape = 'u8[8192]{0}', space=vmem, size = 0x2000, scoped, tag = 'input window, operand 1, single buffered']
    #allocation5 [shape = 's32[1]{0}', space=sflag, size = 0x4, scoped, tag = 'scoped memory for tpu_custom_call.1']
    #allocation6 [shape = 's32[1]{0}', space=sflag, size = 0x4, scoped, tag = 'scoped memory for tpu_custom_call.1']
    #allocation7 [shape = 'u8[4096]{0}', space=vmem, size = 0x1000, scoped, tag = 'output window, operand 0, single buffered']
    %11 = vsyncpa [#allocation5], 0
    %12 = vsyncpa [#allocation6], 0
    // Predicated region
    $region2: #{tpu_custom_call.1} parent=1 // pred_check
      _
    $region3: #{tpu_custom_call.1} parent=1 // pred_check_branch
      %14 = sbr.rel (0) target = $region5
    $region4: #{tpu_custom_call.1} parent=1 // pred_region
      %s16 = ssub.s32 256, 256
      %17 = vsyncadd [#allocation5], %s16
      %s18 = sshll.u32 [#allocation4], 4
      %s19 = int_to_ptr.vmem [resolvable:$true] %s18
      %24 = dma.hbm_to_vmem [thread:$0]  %s1, 256, %s19, [#allocation5], 128, 128, 8
    $region5: #{tpu_custom_call.1} parent=1 // pred_fallthru
      _
    // Predicated region
    $region6: #{tpu_custom_call.1} parent=1 // pred_check
      _
    $region7: #{tpu_custom_call.1} parent=1 // pred_check_branch
      %26 = sbr.rel (0) target = $region9
    $region8: #{tpu_custom_call.1} parent=1 // pred_region
      %27 = dma.done [#allocation5], 256
    $region9: #{tpu_custom_call.1} parent=1 // pred_fallthru
      _
    %v28 = vld [vmem:[#allocation4] sm:$0xff]
    %s29 = scalar_lea.vmem [#allocation4], 8
    %v30 = vld [vmem:[%s29] sm:$0xff]
    %s31 = sld [smem:[#allocation3]]
    %s32 = sld [smem:[#allocation3 + $0x1]]
    %s33 = sld [smem:[#allocation3 + $0x2]]
    %s34 = sld [smem:[#allocation3 + $0x3]]
    %s35 = sld [smem:[#allocation3 + $0x4]]
    %s36 = sld [smem:[#allocation3 + $0x5]]
    %s37 = sld [smem:[#allocation3 + $0x6]]
    %s38 = sld [smem:[#allocation3 + $0x7]]
    %s39 = sld [smem:[#allocation3 + $0x8]]
    %v40 = vstv %s31
    %v41 = vmul.f32 %v28, %v40
    %v42 = vstv %s33
    %v43 = vmul.f32 %v30, %v42
    %v44 = vadd.f32 %v41, %v43
    %v45 = vstv %s35
    %v46 = vadd.f32 %v44, %v45
    %v47 = vmul.f32 %v46, 0.5
    %v48 = vtanh.pop %v47
    %v49 = vmul.f32 %v48, 0.5
    %v50 = vadd.f32 %v49, 0.5
    %v51 = vstv %s32
    %v52 = vmul.f32 %v28, %v51
    %v53 = vstv %s34
    %v54 = vmul.f32 %v30, %v53
    %v55 = vadd.f32 %v52, %v54
    %v56 = vstv %s36
    %v57 = vadd.f32 %v55, %v56
    %v58 = vmul.f32 %v57, 0.5
    %v59 = vtanh.pop %v58
    %v60 = vmul.f32 %v59, 0.5
    %v61 = vadd.f32 %v60, 0.5
    %v62 = vstv %s37
    %v63 = vmul.f32 %v50, %v62
    %v64 = vstv %s38
    %v65 = vmul.f32 %v61, %v64
    %v66 = vadd.f32 %v63, %v65
    %v67 = vstv %s39
    %v68 = vadd.f32 %v66, %v67
    %v69 = vmul.f32 %v68, 0.5
    %v70 = vtanh.pop %v69
    %v71 = vmul.f32 %v70, 0.5
    %v72 = vadd.f32 %v71, 0.5
    %73 = vst [vmem:[#allocation7] sm:$0xff] %v72
    // Predicated region
    $region10: #{tpu_custom_call.1} parent=1 // pred_check
      _
    $region11: #{tpu_custom_call.1} parent=1 // pred_check_branch
      %75 = sbr.rel (0) target = $region13
    $region12: #{tpu_custom_call.1} parent=1 // pred_region
      %s77 = ssub.s32 128, 128
      %78 = vsyncadd [#allocation6], %s77
      %s80 = sshll.u32 [#allocation7], 4
      %s81 = int_to_ptr.vmem [resolvable:$true] %s80
      %83 = dma.vmem_to_hbm [thread:$0]  %s81, 128, %s2, [#allocation6]
    $region13: #{tpu_custom_call.1} parent=1 // pred_fallthru
      _
    // Predicated region
    $region14: #{tpu_custom_call.1} parent=1 // pred_check
      _
    $region15: #{tpu_custom_call.1} parent=1 // pred_check_branch
      %85 = sbr.rel (0) target = $region17
    $region16: #{tpu_custom_call.1} parent=1 // pred_region
      %86 = dma.done [#allocation6], 128
    $region17: #{tpu_custom_call.1} parent=1 // pred_fallthru
      _
    %87 = vsyncpa [#allocation5], 1
    %88 = vsyncpa [#allocation6], 1

</llo_original>
